<compile_context>
chip_gen: v7x
topology: tpu7x:2x2x1
jax: 0.10.0
libtpu: 0.0.40
codegen_flags: <defaults>
</compile_context>

<pallas_src>
import jax
import jax.numpy as jnp
from jax.experimental import pallas as pl
from jax.experimental.pallas import tpu as pltpu  # noqa: F401  (TPU backend)

SIDE = 49
CHANNELS = 16
N_ROWS = SIDE * SIDE  # 2401


def _copy_kernel(x_ref, o_ref):
    # Straight same-shape copy: lowers to plain vld/vst, no cross-sublane
    # shuffle and no extra vreg pressure (input and output share the layout).
    o_ref[...] = x_ref[...]


def view_49x49(x):
    """Equivalent of torch `x276.view(49, 49, -1)` for x of shape (2401, 16)."""
    assert x.shape == (N_ROWS, CHANNELS), x.shape
    nbytes = x.size * jnp.dtype(x.dtype).itemsize

    y = pl.pallas_call(
        _copy_kernel,
        out_shape=jax.ShapeDtypeStruct((N_ROWS, CHANNELS), x.dtype),
        # Single grid point; block shapes equal the full array shapes, so the
        # (8, 128) divisibility rule does not apply.  Whole tensor (~150 KiB)
        # fits trivially in VMEM; no grid / no multi-buffering (a single-step
        # pipeline gains nothing and would only add per-step overhead).
        in_specs=[pl.BlockSpec((N_ROWS, CHANNELS), lambda: (0, 0))],
        out_specs=pl.BlockSpec((N_ROWS, CHANNELS), lambda: (0, 0)),
        # Advisory hint: zero flops, one read + one write of the tensor, so
        # the XLA scheduler treats this custom call as essentially free.
        cost_estimate=pl.CostEstimate(
            flops=0, transcendentals=0, bytes_accessed=2 * nbytes
        ),
    )(x)

    # Row-major contiguous reshape == torch .view(49, 49, -1); metadata-only
    # in XLA (zero data movement), done outside the kernel.
    return y.reshape(SIDE, SIDE, CHANNELS)


if __name__ == "__main__":
    key = jax.random.PRNGKey(0)
    x276 = jax.random.normal(key, (N_ROWS, CHANNELS), dtype=jnp.float32)

    out = view_49x49(x276)
    jax.block_until_ready(out)

    # Correctness check against plain JAX reshape (== torch .view semantics).
    ref = x276.reshape(SIDE, SIDE, CHANNELS)
    assert out.shape == (SIDE, SIDE, CHANNELS)
    assert out.dtype == x276.dtype
    assert bool(jnp.array_equal(out, ref))

    print("KERNEL_OK")
</pallas_src>

<mosaic_0001>
module attributes {stable_mosaic.version = 11 : i64} {
  func.func @_copy_kernel(%arg0: memref<2401x16xf32, #tpu.memory_space<vmem>>, %arg1: memref<2401x16xf32, #tpu.memory_space<vmem>>) attributes {dimension_semantics = [], scalar_prefetch = 0 : i64, scratch_operands = 0 : i64, tpu.core_type = #tpu.core_type<tc>} {
    %c0 = arith.constant 0 : index
    %c0_0 = arith.constant 0 : index
    %0 = vector.load %arg0[%c0, %c0_0] : memref<2401x16xf32, #tpu.memory_space<vmem>>, vector<2401x16xf32>
    %c0_1 = arith.constant 0 : index
    %c0_2 = arith.constant 0 : index
    %1 = vector.load %arg1[%c0_1, %c0_2] : memref<2401x16xf32, #tpu.memory_space<vmem>>, vector<2401x16xf32>
    tpu.vector_store %arg1[%c0_1, %c0_2], %0 {strides = array<i32>} : memref<2401x16xf32, #tpu.memory_space<vmem>>, vector<2401x16xf32>,
    return
  }
}

</mosaic_0001>

<llo_original>
// kernel: tpu_custom_call.1
$region0: #{tpu_custom_call.1}
  #allocation0 [shape = 'u32[]', space=smem, size = 0x4, offset = 0x4, fixed_abs, tag = 'smem constant byte address 0x4 - core index']
  #allocation1 [shape = 'u32[144,128]{1,0:T(1,128)}', space=vmem, size = 0x12000, scoped, tag = 'internal scratch']
  %s0 = inlined_call_operand.vmem [shape: f32[2401,16], index: 0, kind: input, shape index: {}]
  %s1 = inlined_call_operand.vmem [shape: f32[2401,16], index: 1, kind: output, shape index: {}]
  %s2 = sld [smem:[#allocation0]]
  $region14: #{tpu_custom_call.1} parent=0
    _
  %s4 = ssub.s32 1, %s2
  %s5 = scalar_select 0, %s4, %s2
  // Predicated region
  $region2: #{tpu_custom_call.1} parent=0 // pred_check
    _
  $region3: #{tpu_custom_call.1} parent=0 // pred_check_branch
    %7 = sbr.rel (0) target = $region5
  $region4: #{tpu_custom_call.1} parent=0 // pred_region
    _
  $region5: #{tpu_custom_call.1} parent=0 // pred_fallthru
    _
  %v8 = vld [vmem:[%s0] sm:$0xff]
  %v9 = vld [vmem:[%s0 + $0x8] sm:$0xff]
  %v10 = vld [vmem:[%s0 + $0x10] sm:$0xff]
  %v11 = vld [vmem:[%s0 + $0x18] sm:$0xff]
  %v12 = vld [vmem:[%s0 + $0x20] sm:$0xff]
  %v13 = vld [vmem:[%s0 + $0x28] sm:$0xff]
  %v14 = vld [vmem:[%s0 + $0x30] sm:$0xff]
  %v15 = vld [vmem:[%s0 + $0x38] sm:$0xff]
  %v16 = vld [vmem:[%s0 + $0x40] sm:$0xff]
  %v17 = vld [vmem:[%s0 + $0x48] sm:$0xff]
  %v18 = vld [vmem:[%s0 + $0x50] sm:$0xff]
  %v19 = vld [vmem:[%s0 + $0x58] sm:$0xff]
  %v20 = vld [vmem:[%s0 + $0x60] sm:$0xff]
  %v21 = vld [vmem:[%s0 + $0x68] sm:$0xff]
  %v22 = vld [vmem:[%s0 + $0x70] sm:$0xff]
  %v23 = vld [vmem:[%s0 + $0x78] sm:$0xff]
  %v24 = vld [vmem:[%s0 + $0x80] sm:$0xff]
  %v25 = vld [vmem:[%s0 + $0x88] sm:$0xff]
  %v26 = vld [vmem:[%s0 + $0x90] sm:$0xff]
  %v27 = vld [vmem:[%s0 + $0x98] sm:$0xff]
  %v28 = vld [vmem:[%s0 + $0xa0] sm:$0xff]
  %v29 = vld [vmem:[%s0 + $0xa8] sm:$0xff]
  %v30 = vld [vmem:[%s0 + $0xb0] sm:$0xff]
  %v31 = vld [vmem:[%s0 + $0xb8] sm:$0xff]
  %v32 = vld [vmem:[%s0 + $0xc0] sm:$0xff]
  %v33 = vld [vmem:[%s0 + $0xc8] sm:$0xff]
  %v34 = vld [vmem:[%s0 + $0xd0] sm:$0xff]
  %v35 = vld [vmem:[%s0 + $0xd8] sm:$0xff]
  %v36 = vld [vmem:[%s0 + $0xe0] sm:$0xff]
  %v37 = vld [vmem:[%s0 + $0xe8] sm:$0xff]
  %v38 = vld [vmem:[%s0 + $0xf0] sm:$0xff]
  %v39 = vld [vmem:[%s0 + $0xf8] sm:$0xff]
  %v40 = vld [vmem:[%s0 + $0x100] sm:$0xff]
  %v41 = vld [vmem:[%s0 + $0x108] sm:$0xff]
  %v42 = vld [vmem:[%s0 + $0x110] sm:$0xff]
  %v43 = vld [vmem:[%s0 + $0x118] sm:$0xff]
  %v44 = vld [vmem:[%s0 + $0x120] sm:$0xff]
  %v45 = vld [vmem:[%s0 + $0x128] sm:$0xff]
  %v46 = vld [vmem:[%s0 + $0x130] sm:$0xff]
  %v47 = vld [vmem:[%s0 + $0x138] sm:$0xff]
  %v48 = vld [vmem:[%s0 + $0x140] sm:$0xff]
  %v49 = vld [vmem:[%s0 + $0x148] sm:$0xff]
  %v50 = vld [vmem:[%s0 + $0x150] sm:$0xff]
  %v51 = vld [vmem:[%s0 + $0x158] sm:$0xff]
  %v52 = vld [vmem:[%s0 + $0x160] sm:$0xff]
  %v53 = vld [vmem:[%s0 + $0x168] sm:$0xff]
  %v54 = vld [vmem:[%s0 + $0x170] sm:$0xff]
  %v55 = vld [vmem:[%s0 + $0x178] sm:$0xff]
  %v56 = vld [vmem:[%s0 + $0x180] sm:$0xff]
  %v57 = vld [vmem:[%s0 + $0x188] sm:$0xff]
  %v58 = vld [vmem:[%s0 + $0x190] sm:$0xff]
  %v59 = vld [vmem:[%s0 + $0x198] sm:$0xff]
  %v60 = vld [vmem:[%s0 + $0x1a0] sm:$0xff]
  %v61 = vld [vmem:[%s0 + $0x1a8] sm:$0xff]
  %v62 = vld [vmem:[%s0 + $0x1b0] sm:$0xff]
  %v63 = vld [vmem:[%s0 + $0x1b8] sm:$0xff]
  %v64 = vld [vmem:[%s0 + $0x1c0] sm:$0xff]
  %v65 = vld [vmem:[%s0 + $0x1c8] sm:$0xff]
  %v66 = vld [vmem:[%s0 + $0x1d0] sm:$0xff]
  %v67 = vld [vmem:[%s0 + $0x1d8] sm:$0xff]
  %v68 = vld [vmem:[%s0 + $0x1e0] sm:$0xff]
  %v69 = vld [vmem:[%s0 + $0x1e8] sm:$0xff]
  %v70 = vld [vmem:[%s0 + $0x1f0] sm:$0xff]
  %v71 = vld [vmem:[%s0 + $0x1f8] sm:$0xff]
  %v72 = vld [vmem:[%s0 + $0x200] sm:$0xff]
  %v73 = vld [vmem:[%s0 + $0x208] sm:$0xff]
  %v74 = vld [vmem:[%s0 + $0x210] sm:$0xff]
  %v75 = vld [vmem:[%s0 + $0x218] sm:$0xff]
  %v76 = vld [vmem:[%s0 + $0x220] sm:$0xff]
  %v77 = vld [vmem:[%s0 + $0x228] sm:$0xff]
  %v78 = vld [vmem:[%s0 + $0x230] sm:$0xff]
  %v79 = vld [vmem:[%s0 + $0x238] sm:$0xff]
  %v80 = vld [vmem:[%s0 + $0x240] sm:$0xff]
  %v81 = vld [vmem:[%s0 + $0x248] sm:$0xff]
  %v82 = vld [vmem:[%s0 + $0x250] sm:$0xff]
  %v83 = vld [vmem:[%s0 + $0x258] sm:$0xff]
  %v84 = vld [vmem:[%s0 + $0x260] sm:$0xff]
  %v85 = vld [vmem:[%s0 + $0x268] sm:$0xff]
  %v86 = vld [vmem:[%s0 + $0x270] sm:$0xff]
  %v87 = vld [vmem:[%s0 + $0x278] sm:$0xff]
  %v88 = vld [vmem:[%s0 + $0x280] sm:$0xff]
  %v89 = vld [vmem:[%s0 + $0x288] sm:$0xff]
  %v90 = vld [vmem:[%s0 + $0x290] sm:$0xff]
  %v91 = vld [vmem:[%s0 + $0x298] sm:$0xff]
  %v92 = vld [vmem:[%s0 + $0x2a0] sm:$0xff]
  %v93 = vld [vmem:[%s0 + $0x2a8] sm:$0xff]
  %v94 = vld [vmem:[%s0 + $0x2b0] sm:$0xff]
  %v95 = vld [vmem:[%s0 + $0x2b8] sm:$0xff]
  %v96 = vld [vmem:[%s0 + $0x2c0] sm:$0xff]
  %v97 = vld [vmem:[%s0 + $0x2c8] sm:$0xff]
  %v98 = vld [vmem:[%s0 + $0x2d0] sm:$0xff]
  %v99 = vld [vmem:[%s0 + $0x2d8] sm:$0xff]
  %v100 = vld [vmem:[%s0 + $0x2e0] sm:$0xff]
  %v101 = vld [vmem:[%s0 + $0x2e8] sm:$0xff]
  %v102 = vld [vmem:[%s0 + $0x2f0] sm:$0xff]
  %v103 = vld [vmem:[%s0 + $0x2f8] sm:$0xff]
  %v104 = vld [vmem:[%s0 + $0x300] sm:$0xff]
  %v105 = vld [vmem:[%s0 + $0x308] sm:$0xff]
  %v106 = vld [vmem:[%s0 + $0x310] sm:$0xff]
  %v107 = vld [vmem:[%s0 + $0x318] sm:$0xff]
  %v108 = vld [vmem:[%s0 + $0x320] sm:$0xff]
  %v109 = vld [vmem:[%s0 + $0x328] sm:$0xff]
  %v110 = vld [vmem:[%s0 + $0x330] sm:$0xff]
  %v111 = vld [vmem:[%s0 + $0x338] sm:$0xff]
  %v112 = vld [vmem:[%s0 + $0x340] sm:$0xff]
  %v113 = vld [vmem:[%s0 + $0x348] sm:$0xff]
  %v114 = vld [vmem:[%s0 + $0x350] sm:$0xff]
  %v115 = vld [vmem:[%s0 + $0x358] sm:$0xff]
  %v116 = vld [vmem:[%s0 + $0x360] sm:$0xff]
  %v117 = vld [vmem:[%s0 + $0x368] sm:$0xff]
  %v118 = vld [vmem:[%s0 + $0x370] sm:$0xff]
  %v119 = vld [vmem:[%s0 + $0x378] sm:$0xff]
  %v120 = vld [vmem:[%s0 + $0x380] sm:$0xff]
  %v121 = vld [vmem:[%s0 + $0x388] sm:$0xff]
  %v122 = vld [vmem:[%s0 + $0x390] sm:$0xff]
  %v123 = vld [vmem:[%s0 + $0x398] sm:$0xff]
  %v124 = vld [vmem:[%s0 + $0x3a0] sm:$0xff]
  %v125 = vld [vmem:[%s0 + $0x3a8] sm:$0xff]
  %v126 = vld [vmem:[%s0 + $0x3b0] sm:$0xff]
  %v127 = vld [vmem:[%s0 + $0x3b8] sm:$0xff]
  %v128 = vld [vmem:[%s0 + $0x3c0] sm:$0xff]
  %v129 = vld [vmem:[%s0 + $0x3c8] sm:$0xff]
  %v130 = vld [vmem:[%s0 + $0x3d0] sm:$0xff]
  %v131 = vld [vmem:[%s0 + $0x3d8] sm:$0xff]
  %v132 = vld [vmem:[%s0 + $0x3e0] sm:$0xff]
  %v133 = vld [vmem:[%s0 + $0x3e8] sm:$0xff]
  %v134 = vld [vmem:[%s0 + $0x3f0] sm:$0xff]
  %v135 = vld [vmem:[%s0 + $0x3f8] sm:$0xff]
  %v136 = vld [vmem:[%s0 + $0x400] sm:$0xff]
  %v137 = vld [vmem:[%s0 + $0x408] sm:$0xff]
  %v138 = vld [vmem:[%s0 + $0x410] sm:$0xff]
  %v139 = vld [vmem:[%s0 + $0x418] sm:$0xff]
  %v140 = vld [vmem:[%s0 + $0x420] sm:$0xff]
  %v141 = vld [vmem:[%s0 + $0x428] sm:$0xff]
  %v142 = vld [vmem:[%s0 + $0x430] sm:$0xff]
  %v143 = vld [vmem:[%s0 + $0x438] sm:$0xff]
  %v144 = vld [vmem:[%s0 + $0x440] sm:$0xff]
  %v145 = vld [vmem:[%s0 + $0x448] sm:$0xff]
  %v146 = vld [vmem:[%s0 + $0x450] sm:$0xff]
  %v147 = vld [vmem:[%s0 + $0x458] sm:$0xff]
  %v148 = vld [vmem:[%s0 + $0x460] sm:$0xff]
  %v149 = vld [vmem:[%s0 + $0x468] sm:$0xff]
  %v150 = vld [vmem:[%s0 + $0x470] sm:$0xff]
  %v151 = vld [vmem:[%s0 + $0x478] sm:$0xff]
  %v152 = vld [vmem:[%s0 + $0x480] sm:$0xff]
  %v153 = vld [vmem:[%s0 + $0x488] sm:$0xff]
  %v154 = vld [vmem:[%s0 + $0x490] sm:$0xff]
  %v155 = vld [vmem:[%s0 + $0x498] sm:$0xff]
  %v156 = vld [vmem:[%s0 + $0x4a0] sm:$0xff]
  %v157 = vld [vmem:[%s0 + $0x4a8] sm:$0xff]
  %v158 = vld [vmem:[%s0 + $0x4b0] sm:$0xff]
  %v159 = vld [vmem:[%s0 + $0x4b8] sm:$0xff]
  %v160 = vld [vmem:[%s0 + $0x4c0] sm:$0xff]
  %v161 = vld [vmem:[%s0 + $0x4c8] sm:$0xff]
  %v162 = vld [vmem:[%s0 + $0x4d0] sm:$0xff]
  %v163 = vld [vmem:[%s0 + $0x4d8] sm:$0xff]
  %v164 = vld [vmem:[%s0 + $0x4e0] sm:$0xff]
  %v165 = vld [vmem:[%s0 + $0x4e8] sm:$0xff]
  %v166 = vld [vmem:[%s0 + $0x4f0] sm:$0xff]
  %v167 = vld [vmem:[%s0 + $0x4f8] sm:$0xff]
  %v168 = vld [vmem:[%s0 + $0x500] sm:$0xff]
  %v169 = vld [vmem:[%s0 + $0x508] sm:$0xff]
  %v170 = vld [vmem:[%s0 + $0x510] sm:$0xff]
  %v171 = vld [vmem:[%s0 + $0x518] sm:$0xff]
  %v172 = vld [vmem:[%s0 + $0x520] sm:$0xff]
  %v173 = vld [vmem:[%s0 + $0x528] sm:$0xff]
  %v174 = vld [vmem:[%s0 + $0x530] sm:$0xff]
  %v175 = vld [vmem:[%s0 + $0x538] sm:$0xff]
  %v176 = vld [vmem:[%s0 + $0x540] sm:$0xff]
  %v177 = vld [vmem:[%s0 + $0x548] sm:$0xff]
  %v178 = vld [vmem:[%s0 + $0x550] sm:$0xff]
  %v179 = vld [vmem:[%s0 + $0x558] sm:$0xff]
  %v180 = vld [vmem:[%s0 + $0x560] sm:$0xff]
  %v181 = vld [vmem:[%s0 + $0x568] sm:$0xff]
  %v182 = vld [vmem:[%s0 + $0x570] sm:$0xff]
  %v183 = vld [vmem:[%s0 + $0x578] sm:$0xff]
  %v184 = vld [vmem:[%s0 + $0x580] sm:$0xff]
  %v185 = vld [vmem:[%s0 + $0x588] sm:$0xff]
  %v186 = vld [vmem:[%s0 + $0x590] sm:$0xff]
  %v187 = vld [vmem:[%s0 + $0x598] sm:$0xff]
  %v188 = vld [vmem:[%s0 + $0x5a0] sm:$0xff]
  %v189 = vld [vmem:[%s0 + $0x5a8] sm:$0xff]
  %v190 = vld [vmem:[%s0 + $0x5b0] sm:$0xff]
  %v191 = vld [vmem:[%s0 + $0x5b8] sm:$0xff]
  %v192 = vld [vmem:[%s0 + $0x5c0] sm:$0xff]
  %v193 = vld [vmem:[%s0 + $0x5c8] sm:$0xff]
  %v194 = vld [vmem:[%s0 + $0x5d0] sm:$0xff]
  %v195 = vld [vmem:[%s0 + $0x5d8] sm:$0xff]
  %v196 = vld [vmem:[%s0 + $0x5e0] sm:$0xff]
  %v197 = vld [vmem:[%s0 + $0x5e8] sm:$0xff]
  %v198 = vld [vmem:[%s0 + $0x5f0] sm:$0xff]
  %v199 = vld [vmem:[%s0 + $0x5f8] sm:$0xff]
  %v200 = vld [vmem:[%s0 + $0x600] sm:$0xff]
  %v201 = vld [vmem:[%s0 + $0x608] sm:$0xff]
  %v202 = vld [vmem:[%s0 + $0x610] sm:$0xff]
  %v203 = vld [vmem:[%s0 + $0x618] sm:$0xff]
  %v204 = vld [vmem:[%s0 + $0x620] sm:$0xff]
  %v205 = vld [vmem:[%s0 + $0x628] sm:$0xff]
  %v206 = vld [vmem:[%s0 + $0x630] sm:$0xff]
  %v207 = vld [vmem:[%s0 + $0x638] sm:$0xff]
  %v208 = vld [vmem:[%s0 + $0x640] sm:$0xff]
  %v209 = vld [vmem:[%s0 + $0x648] sm:$0xff]
  %v210 = vld [vmem:[%s0 + $0x650] sm:$0xff]
  %v211 = vld [vmem:[%s0 + $0x658] sm:$0xff]
  %v212 = vld [vmem:[%s0 + $0x660] sm:$0xff]
  %v213 = vld [vmem:[%s0 + $0x668] sm:$0xff]
  %v214 = vld [vmem:[%s0 + $0x670] sm:$0xff]
  %v215 = vld [vmem:[%s0 + $0x678] sm:$0xff]
  %v216 = vld [vmem:[%s0 + $0x680] sm:$0xff]
  %v217 = vld [vmem:[%s0 + $0x688] sm:$0xff]
  %v218 = vld [vmem:[%s0 + $0x690] sm:$0xff]
  %v219 = vld [vmem:[%s0 + $0x698] sm:$0xff]
  %v220 = vld [vmem:[%s0 + $0x6a0] sm:$0xff]
  %v221 = vld [vmem:[%s0 + $0x6a8] sm:$0xff]
  %v222 = vld [vmem:[%s0 + $0x6b0] sm:$0xff]
  %v223 = vld [vmem:[%s0 + $0x6b8] sm:$0xff]
  %v224 = vld [vmem:[%s0 + $0x6c0] sm:$0xff]
  %v225 = vld [vmem:[%s0 + $0x6c8] sm:$0xff]
  %v226 = vld [vmem:[%s0 + $0x6d0] sm:$0xff]
  %v227 = vld [vmem:[%s0 + $0x6d8] sm:$0xff]
  %v228 = vld [vmem:[%s0 + $0x6e0] sm:$0xff]
  %v229 = vld [vmem:[%s0 + $0x6e8] sm:$0xff]
  %v230 = vld [vmem:[%s0 + $0x6f0] sm:$0xff]
  %v231 = vld [vmem:[%s0 + $0x6f8] sm:$0xff]
  %v232 = vld [vmem:[%s0 + $0x700] sm:$0xff]
  %v233 = vld [vmem:[%s0 + $0x708] sm:$0xff]
  %v234 = vld [vmem:[%s0 + $0x710] sm:$0xff]
  %v235 = vld [vmem:[%s0 + $0x718] sm:$0xff]
  %v236 = vld [vmem:[%s0 + $0x720] sm:$0xff]
  %v237 = vld [vmem:[%s0 + $0x728] sm:$0xff]
  %v238 = vld [vmem:[%s0 + $0x730] sm:$0xff]
  %v239 = vld [vmem:[%s0 + $0x738] sm:$0xff]
  %v240 = vld [vmem:[%s0 + $0x740] sm:$0xff]
  %v241 = vld [vmem:[%s0 + $0x748] sm:$0xff]
  %v242 = vld [vmem:[%s0 + $0x750] sm:$0xff]
  %v243 = vld [vmem:[%s0 + $0x758] sm:$0xff]
  %v244 = vld [vmem:[%s0 + $0x760] sm:$0xff]
  %v245 = vld [vmem:[%s0 + $0x768] sm:$0xff]
  %v246 = vld [vmem:[%s0 + $0x770] sm:$0xff]
  %v247 = vld [vmem:[%s0 + $0x778] sm:$0xff]
  %v248 = vld [vmem:[%s0 + $0x780] sm:$0xff]
  %v249 = vld [vmem:[%s0 + $0x788] sm:$0xff]
  %v250 = vld [vmem:[%s0 + $0x790] sm:$0xff]
  %v251 = vld [vmem:[%s0 + $0x798] sm:$0xff]
  %v252 = vld [vmem:[%s0 + $0x7a0] sm:$0xff]
  %v253 = vld [vmem:[%s0 + $0x7a8] sm:$0xff]
  %v254 = vld [vmem:[%s0 + $0x7b0] sm:$0xff]
  %v255 = vld [vmem:[%s0 + $0x7b8] sm:$0xff]
  %v256 = vld [vmem:[%s0 + $0x7c0] sm:$0xff]
  %v257 = vld [vmem:[%s0 + $0x7c8] sm:$0xff]
  %v258 = vld [vmem:[%s0 + $0x7d0] sm:$0xff]
  %v259 = vld [vmem:[%s0 + $0x7d8] sm:$0xff]
  %v260 = vld [vmem:[%s0 + $0x7e0] sm:$0xff]
  %v261 = vld [vmem:[%s0 + $0x7e8] sm:$0xff]
  %v262 = vld [vmem:[%s0 + $0x7f0] sm:$0xff]
  %v263 = vld [vmem:[%s0 + $0x7f8] sm:$0xff]
  %v264 = vld [vmem:[%s0 + $0x800] sm:$0xff]
  %v265 = vld [vmem:[%s0 + $0x808] sm:$0xff]
  %v266 = vld [vmem:[%s0 + $0x810] sm:$0xff]
  %v267 = vld [vmem:[%s0 + $0x818] sm:$0xff]
  %v268 = vld [vmem:[%s0 + $0x820] sm:$0xff]
  %v269 = vld [vmem:[%s0 + $0x828] sm:$0xff]
  %v270 = vld [vmem:[%s0 + $0x830] sm:$0xff]
  %v271 = vld [vmem:[%s0 + $0x838] sm:$0xff]
  %v272 = vld [vmem:[%s0 + $0x840] sm:$0xff]
  %v273 = vld [vmem:[%s0 + $0x848] sm:$0xff]
  %v274 = vld [vmem:[%s0 + $0x850] sm:$0xff]
  %v275 = vld [vmem:[%s0 + $0x858] sm:$0xff]
  %v276 = vld [vmem:[%s0 + $0x860] sm:$0xff]
  %v277 = vld [vmem:[%s0 + $0x868] sm:$0xff]
  %v278 = vld [vmem:[%s0 + $0x870] sm:$0xff]
  %v279 = vld [vmem:[%s0 + $0x878] sm:$0xff]
  %v280 = vld [vmem:[%s0 + $0x880] sm:$0xff]
  %v281 = vld [vmem:[%s0 + $0x888] sm:$0xff]
  %v282 = vld [vmem:[%s0 + $0x890] sm:$0xff]
  %v283 = vld [vmem:[%s0 + $0x898] sm:$0xff]
  %v284 = vld [vmem:[%s0 + $0x8a0] sm:$0xff]
  %v285 = vld [vmem:[%s0 + $0x8a8] sm:$0xff]
  %v286 = vld [vmem:[%s0 + $0x8b0] sm:$0xff]
  %v287 = vld [vmem:[%s0 + $0x8b8] sm:$0xff]
  %v288 = vld [vmem:[%s0 + $0x8c0] sm:$0xff]
  %v289 = vld [vmem:[%s0 + $0x8c8] sm:$0xff]
  %v290 = vld [vmem:[%s0 + $0x8d0] sm:$0xff]
  %v291 = vld [vmem:[%s0 + $0x8d8] sm:$0xff]
  %v292 = vld [vmem:[%s0 + $0x8e0] sm:$0xff]
  %v293 = vld [vmem:[%s0 + $0x8e8] sm:$0xff]
  %v294 = vld [vmem:[%s0 + $0x8f0] sm:$0xff]
  %v295 = vld [vmem:[%s0 + $0x8f8] sm:$0xff]
  %v296 = vld [vmem:[%s0 + $0x900] sm:$0xff]
  %v297 = vld [vmem:[%s0 + $0x908] sm:$0xff]
  %v298 = vld [vmem:[%s0 + $0x910] sm:$0xff]
  %v299 = vld [vmem:[%s0 + $0x918] sm:$0xff]
  %v300 = vld [vmem:[%s0 + $0x920] sm:$0xff]
  %v301 = vld [vmem:[%s0 + $0x928] sm:$0xff]
  %v302 = vld [vmem:[%s0 + $0x930] sm:$0xff]
  %v303 = vld [vmem:[%s0 + $0x938] sm:$0xff]
  %v304 = vld [vmem:[%s0 + $0x940] sm:$0xff]
  %v305 = vld [vmem:[%s0 + $0x948] sm:$0xff]
  %v306 = vld [vmem:[%s0 + $0x950] sm:$0xff]
  %v307 = vld [vmem:[%s0 + $0x958] sm:$0xff]
  %v308 = vld [vmem:[%s0 + $0x960] sm:$0x1]
  %vm309 = vcmask 130048
  %310 = vst.msk [vmem:[%s1] sm:$0xff] %vm309, %v8
  %311 = vst.msk [vmem:[%s1 + $0x8] sm:$0xff] %vm309, %v9
  %312 = vst.msk [vmem:[%s1 + $0x10] sm:$0xff] %vm309, %v10
  %313 = vst.msk [vmem:[%s1 + $0x18] sm:$0xff] %vm309, %v11
  %314 = vst.msk [vmem:[%s1 + $0x20] sm:$0xff] %vm309, %v12
  %315 = vst.msk [vmem:[%s1 + $0x28] sm:$0xff] %vm309, %v13
  %316 = vst.msk [vmem:[%s1 + $0x30] sm:$0xff] %vm309, %v14
  %317 = vst.msk [vmem:[%s1 + $0x38] sm:$0xff] %vm309, %v15
  %318 = vst.msk [vmem:[%s1 + $0x40] sm:$0xff] %vm309, %v16
  %319 = vst.msk [vmem:[%s1 + $0x48] sm:$0xff] %vm309, %v17
  %320 = vst.msk [vmem:[%s1 + $0x50] sm:$0xff] %vm309, %v18
  %321 = vst.msk [vmem:[%s1 + $0x58] sm:$0xff] %vm309, %v19
  %322 = vst.msk [vmem:[%s1 + $0x60] sm:$0xff] %vm309, %v20
  %323 = vst.msk [vmem:[%s1 + $0x68] sm:$0xff] %vm309, %v21
  %324 = vst.msk [vmem:[%s1 + $0x70] sm:$0xff] %vm309, %v22
  %325 = vst.msk [vmem:[%s1 + $0x78] sm:$0xff] %vm309, %v23
  %326 = vst.msk [vmem:[%s1 + $0x80] sm:$0xff] %vm309, %v24
  %327 = vst.msk [vmem:[%s1 + $0x88] sm:$0xff] %vm309, %v25
  %328 = vst.msk [vmem:[%s1 + $0x90] sm:$0xff] %vm309, %v26
  %329 = vst.msk [vmem:[%s1 + $0x98] sm:$0xff] %vm309, %v27
  %330 = vst.msk [vmem:[%s1 + $0xa0] sm:$0xff] %vm309, %v28
  %331 = vst.msk [vmem:[%s1 + $0xa8] sm:$0xff] %vm309, %v29
  %332 = vst.msk [vmem:[%s1 + $0xb0] sm:$0xff] %vm309, %v30
  %333 = vst.msk [vmem:[%s1 + $0xb8] sm:$0xff] %vm309, %v31
  %334 = vst.msk [vmem:[%s1 + $0xc0] sm:$0xff] %vm309, %v32
  %335 = vst.msk [vmem:[%s1 + $0xc8] sm:$0xff] %vm309, %v33
  %336 = vst.msk [vmem:[%s1 + $0xd0] sm:$0xff] %vm309, %v34
  %337 = vst.msk [vmem:[%s1 + $0xd8] sm:$0xff] %vm309, %v35
  %338 = vst.msk [vmem:[%s1 + $0xe0] sm:$0xff] %vm309, %v36
  %339 = vst.msk [vmem:[%s1 + $0xe8] sm:$0xff] %vm309, %v37
  %340 = vst.msk [vmem:[%s1 + $0xf0] sm:$0xff] %vm309, %v38
  %341 = vst.msk [vmem:[%s1 + $0xf8] sm:$0xff] %vm309, %v39
  %342 = vst.msk [vmem:[%s1 + $0x100] sm:$0xff] %vm309, %v40
  %343 = vst.msk [vmem:[%s1 + $0x108] sm:$0xff] %vm309, %v41
  %344 = vst.msk [vmem:[%s1 + $0x110] sm:$0xff] %vm309, %v42
  %345 = vst.msk [vmem:[%s1 + $0x118] sm:$0xff] %vm309, %v43
  %346 = vst.msk [vmem:[%s1 + $0x120] sm:$0xff] %vm309, %v44
  %347 = vst.msk [vmem:[%s1 + $0x128] sm:$0xff] %vm309, %v45
  %348 = vst.msk [vmem:[%s1 + $0x130] sm:$0xff] %vm309, %v46
  %349 = vst.msk [vmem:[%s1 + $0x138] sm:$0xff] %vm309, %v47
  %350 = vst.msk [vmem:[%s1 + $0x140] sm:$0xff] %vm309, %v48
  %351 = vst.msk [vmem:[%s1 + $0x148] sm:$0xff] %vm309, %v49
  %352 = vst.msk [vmem:[%s1 + $0x150] sm:$0xff] %vm309, %v50
  %353 = vst.msk [vmem:[%s1 + $0x158] sm:$0xff] %vm309, %v51
  %354 = vst.msk [vmem:[%s1 + $0x160] sm:$0xff] %vm309, %v52
  %355 = vst.msk [vmem:[%s1 + $0x168] sm:$0xff] %vm309, %v53
  %356 = vst.msk [vmem:[%s1 + $0x170] sm:$0xff] %vm309, %v54
  %357 = vst.msk [vmem:[%s1 + $0x178] sm:$0xff] %vm309, %v55
  %358 = vst.msk [vmem:[%s1 + $0x180] sm:$0xff] %vm309, %v56
  %359 = vst.msk [vmem:[%s1 + $0x188] sm:$0xff] %vm309, %v57
  %360 = vst.msk [vmem:[%s1 + $0x190] sm:$0xff] %vm309, %v58
  %361 = vst.msk [vmem:[%s1 + $0x198] sm:$0xff] %vm309, %v59
  %362 = vst.msk [vmem:[%s1 + $0x1a0] sm:$0xff] %vm309, %v60
  %363 = vst.msk [vmem:[%s1 + $0x1a8] sm:$0xff] %vm309, %v61
  %364 = vst.msk [vmem:[%s1 + $0x1b0] sm:$0xff] %vm309, %v62
  %365 = vst.msk [vmem:[%s1 + $0x1b8] sm:$0xff] %vm309, %v63
  %366 = vst.msk [vmem:[%s1 + $0x1c0] sm:$0xff] %vm309, %v64
  %367 = vst.msk [vmem:[%s1 + $0x1c8] sm:$0xff] %vm309, %v65
  %368 = vst.msk [vmem:[%s1 + $0x1d0] sm:$0xff] %vm309, %v66
  %369 = vst.msk [vmem:[%s1 + $0x1d8] sm:$0xff] %vm309, %v67
  %370 = vst.msk [vmem:[%s1 + $0x1e0] sm:$0xff] %vm309, %v68
  %371 = vst.msk [vmem:[%s1 + $0x1e8] sm:$0xff] %vm309, %v69
  %372 = vst.msk [vmem:[%s1 + $0x1f0] sm:$0xff] %vm309, %v70
  %373 = vst.msk [vmem:[%s1 + $0x1f8] sm:$0xff] %vm309, %v71
  %374 = vst.msk [vmem:[%s1 + $0x200] sm:$0xff] %vm309, %v72
  %375 = vst.msk [vmem:[%s1 + $0x208] sm:$0xff] %vm309, %v73
  %376 = vst.msk [vmem:[%s1 + $0x210] sm:$0xff] %vm309, %v74
  %377 = vst.msk [vmem:[%s1 + $0x218] sm:$0xff] %vm309, %v75
  %378 = vst.msk [vmem:[%s1 + $0x220] sm:$0xff] %vm309, %v76
  %379 = vst.msk [vmem:[%s1 + $0x228] sm:$0xff] %vm309, %v77
  %380 = vst.msk [vmem:[%s1 + $0x230] sm:$0xff] %vm309, %v78
  %381 = vst.msk [vmem:[%s1 + $0x238] sm:$0xff] %vm309, %v79
  %382 = vst.msk [vmem:[%s1 + $0x240] sm:$0xff] %vm309, %v80
  %383 = vst.msk [vmem:[%s1 + $0x248] sm:$0xff] %vm309, %v81
  %384 = vst.msk [vmem:[%s1 + $0x250] sm:$0xff] %vm309, %v82
  %385 = vst.msk [vmem:[%s1 + $0x258] sm:$0xff] %vm309, %v83
  %386 = vst.msk [vmem:[%s1 + $0x260] sm:$0xff] %vm309, %v84
  %387 = vst.msk [vmem:[%s1 + $0x268] sm:$0xff] %vm309, %v85
  %388 = vst.msk [vmem:[%s1 + $0x270] sm:$0xff] %vm309, %v86
  %389 = vst.msk [vmem:[%s1 + $0x278] sm:$0xff] %vm309, %v87
  %390 = vst.msk [vmem:[%s1 + $0x280] sm:$0xff] %vm309, %v88
  %391 = vst.msk [vmem:[%s1 + $0x288] sm:$0xff] %vm309, %v89
  %392 = vst.msk [vmem:[%s1 + $0x290] sm:$0xff] %vm309, %v90
  %393 = vst.msk [vmem:[%s1 + $0x298] sm:$0xff] %vm309, %v91
  %394 = vst.msk [vmem:[%s1 + $0x2a0] sm:$0xff] %vm309, %v92
  %395 = vst.msk [vmem:[%s1 + $0x2a8] sm:$0xff] %vm309, %v93
  %396 = vst.msk [vmem:[%s1 + $0x2b0] sm:$0xff] %vm309, %v94
  %397 = vst.msk [vmem:[%s1 + $0x2b8] sm:$0xff] %vm309, %v95
  %398 = vst.msk [vmem:[%s1 + $0x2c0] sm:$0xff] %vm309, %v96
  %399 = vst.msk [vmem:[%s1 + $0x2c8] sm:$0xff] %vm309, %v97
  %400 = vst.msk [vmem:[%s1 + $0x2d0] sm:$0xff] %vm309, %v98
  %401 = vst.msk [vmem:[%s1 + $0x2d8] sm:$0xff] %vm309, %v99
  %402 = vst.msk [vmem:[%s1 + $0x2e0] sm:$0xff] %vm309, %v100
  %403 = vst.msk [vmem:[%s1 + $0x2e8] sm:$0xff] %vm309, %v101
  %404 = vst.msk [vmem:[%s1 + $0x2f0] sm:$0xff] %vm309, %v102
  %405 = vst.msk [vmem:[%s1 + $0x2f8] sm:$0xff] %vm309, %v103
  %406 = vst.msk [vmem:[%s1 + $0x300] sm:$0xff] %vm309, %v104
  %407 = vst.msk [vmem:[%s1 + $0x308] sm:$0xff] %vm309, %v105
  %408 = vst.msk [vmem:[%s1 + $0x310] sm:$0xff] %vm309, %v106
  %409 = vst.msk [vmem:[%s1 + $0x318] sm:$0xff] %vm309, %v107
  %410 = vst.msk [vmem:[%s1 + $0x320] sm:$0xff] %vm309, %v108
  %411 = vst.msk [vmem:[%s1 + $0x328] sm:$0xff] %vm309, %v109
  %412 = vst.msk [vmem:[%s1 + $0x330] sm:$0xff] %vm309, %v110
  %413 = vst.msk [vmem:[%s1 + $0x338] sm:$0xff] %vm309, %v111
  %414 = vst.msk [vmem:[%s1 + $0x340] sm:$0xff] %vm309, %v112
  %415 = vst.msk [vmem:[%s1 + $0x348] sm:$0xff] %vm309, %v113
  %416 = vst.msk [vmem:[%s1 + $0x350] sm:$0xff] %vm309, %v114
  %417 = vst.msk [vmem:[%s1 + $0x358] sm:$0xff] %vm309, %v115
  %418 = vst.msk [vmem:[%s1 + $0x360] sm:$0xff] %vm309, %v116
  %419 = vst.msk [vmem:[%s1 + $0x368] sm:$0xff] %vm309, %v117
  %420 = vst.msk [vmem:[%s1 + $0x370] sm:$0xff] %vm309, %v118
  %421 = vst.msk [vmem:[%s1 + $0x378] sm:$0xff] %vm309, %v119
  %422 = vst.msk [vmem:[%s1 + $0x380] sm:$0xff] %vm309, %v120
  %423 = vst.msk [vmem:[%s1 + $0x388] sm:$0xff] %vm309, %v121
  %424 = vst.msk [vmem:[%s1 + $0x390] sm:$0xff] %vm309, %v122
  %425 = vst.msk [vmem:[%s1 + $0x398] sm:$0xff] %vm309, %v123
  %426 = vst.msk [vmem:[%s1 + $0x3a0] sm:$0xff] %vm309, %v124
  %427 = vst.msk [vmem:[%s1 + $0x3a8] sm:$0xff] %vm309, %v125
  %428 = vst.msk [vmem:[%s1 + $0x3b0] sm:$0xff] %vm309, %v126
  %429 = vst.msk [vmem:[%s1 + $0x3b8] sm:$0xff] %vm309, %v127
  %430 = vst.msk [vmem:[%s1 + $0x3c0] sm:$0xff] %vm309, %v128
  %431 = vst.msk [vmem:[%s1 + $0x3c8] sm:$0xff] %vm309, %v129
  %432 = vst.msk [vmem:[%s1 + $0x3d0] sm:$0xff] %vm309, %v130
  %433 = vst.msk [vmem:[%s1 + $0x3d8] sm:$0xff] %vm309, %v131
  %434 = vst.msk [vmem:[%s1 + $0x3e0] sm:$0xff] %vm309, %v132
  %435 = vst.msk [vmem:[%s1 + $0x3e8] sm:$0xff] %vm309, %v133
  %436 = vst.msk [vmem:[%s1 + $0x3f0] sm:$0xff] %vm309, %v134
  %437 = vst.msk [vmem:[%s1 + $0x3f8] sm:$0xff] %vm309, %v135
  %438 = vst.msk [vmem:[%s1 + $0x400] sm:$0xff] %vm309, %v136
  %439 = vst.msk [vmem:[%s1 + $0x408] sm:$0xff] %vm309, %v137
  %440 = vst.msk [vmem:[%s1 + $0x410] sm:$0xff] %vm309, %v138
  %441 = vst.msk [vmem:[%s1 + $0x418] sm:$0xff] %vm309, %v139
  %442 = vst.msk [vmem:[%s1 + $0x420] sm:$0xff] %vm309, %v140
  %443 = vst.msk [vmem:[%s1 + $0x428] sm:$0xff] %vm309, %v141
  %444 = vst.msk [vmem:[%s1 + $0x430] sm:$0xff] %vm309, %v142
  %445 = vst.msk [vmem:[%s1 + $0x438] sm:$0xff] %vm309, %v143
  %446 = vst.msk [vmem:[%s1 + $0x440] sm:$0xff] %vm309, %v144
  %447 = vst.msk [vmem:[%s1 + $0x448] sm:$0xff] %vm309, %v145
  %448 = vst.msk [vmem:[%s1 + $0x450] sm:$0xff] %vm309, %v146
  %449 = vst.msk [vmem:[%s1 + $0x458] sm:$0xff] %vm309, %v147
  %450 = vst.msk [vmem:[%s1 + $0x460] sm:$0xff] %vm309, %v148
  %451 = vst.msk [vmem:[%s1 + $0x468] sm:$0xff] %vm309, %v149
  %452 = vst.msk [vmem:[%s1 + $0x470] sm:$0xff] %vm309, %v150
  %453 = vst.msk [vmem:[%s1 + $0x478] sm:$0xff] %vm309, %v151
  %454 = vst.msk [vmem:[%s1 + $0x480] sm:$0xff] %vm309, %v152
  %455 = vst.msk [vmem:[%s1 + $0x488] sm:$0xff] %vm309, %v153
  %456 = vst.msk [vmem:[%s1 + $0x490] sm:$0xff] %vm309, %v154
  %457 = vst.msk [vmem:[%s1 + $0x498] sm:$0xff] %vm309, %v155
  %458 = vst.msk [vmem:[%s1 + $0x4a0] sm:$0xff] %vm309, %v156
  %459 = vst.msk [vmem:[%s1 + $0x4a8] sm:$0xff] %vm309, %v157
  %460 = vst.msk [vmem:[%s1 + $0x4b0] sm:$0xff] %vm309, %v158
  %461 = vst.msk [vmem:[%s1 + $0x4b8] sm:$0xff] %vm309, %v159
  %462 = vst.msk [vmem:[%s1 + $0x4c0] sm:$0xff] %vm309, %v160
  %463 = vst.msk [vmem:[%s1 + $0x4c8] sm:$0xff] %vm309, %v161
  %464 = vst.msk [vmem:[%s1 + $0x4d0] sm:$0xff] %vm309, %v162
  %465 = vst.msk [vmem:[%s1 + $0x4d8] sm:$0xff] %vm309, %v163
  %466 = vst.msk [vmem:[%s1 + $0x4e0] sm:$0xff] %vm309, %v164
  %467 = vst.msk [vmem:[%s1 + $0x4e8] sm:$0xff] %vm309, %v165
  %468 = vst.msk [vmem:[%s1 + $0x4f0] sm:$0xff] %vm309, %v166
  %469 = vst.msk [vmem:[%s1 + $0x4f8] sm:$0xff] %vm309, %v167
  %470 = vst.msk [vmem:[%s1 + $0x500] sm:$0xff] %vm309, %v168
  %471 = vst.msk [vmem:[%s1 + $0x508] sm:$0xff] %vm309, %v169
  %472 = vst.msk [vmem:[%s1 + $0x510] sm:$0xff] %vm309, %v170
  %473 = vst.msk [vmem:[%s1 + $0x518] sm:$0xff] %vm309, %v171
  %474 = vst.msk [vmem:[%s1 + $0x520] sm:$0xff] %vm309, %v172
  %475 = vst.msk [vmem:[%s1 + $0x528] sm:$0xff] %vm309, %v173
  %476 = vst.msk [vmem:[%s1 + $0x530] sm:$0xff] %vm309, %v174
  %477 = vst.msk [vmem:[%s1 + $0x538] sm:$0xff] %vm309, %v175
  %478 = vst.msk [vmem:[%s1 + $0x540] sm:$0xff] %vm309, %v176
  %479 = vst.msk [vmem:[%s1 + $0x548] sm:$0xff] %vm309, %v177
  %480 = vst.msk [vmem:[%s1 + $0x550] sm:$0xff] %vm309, %v178
  %481 = vst.msk [vmem:[%s1 + $0x558] sm:$0xff] %vm309, %v179
  %482 = vst.msk [vmem:[%s1 + $0x560] sm:$0xff] %vm309, %v180
  %483 = vst.msk [vmem:[%s1 + $0x568] sm:$0xff] %vm309, %v181
  %484 = vst.msk [vmem:[%s1 + $0x570] sm:$0xff] %vm309, %v182
  %485 = vst.msk [vmem:[%s1 + $0x578] sm:$0xff] %vm309, %v183
  %486 = vst.msk [vmem:[%s1 + $0x580] sm:$0xff] %vm309, %v184
  %487 = vst.msk [vmem:[%s1 + $0x588] sm:$0xff] %vm309, %v185
  %488 = vst.msk [vmem:[%s1 + $0x590] sm:$0xff] %vm309, %v186
  %489 = vst.msk [vmem:[%s1 + $0x598] sm:$0xff] %vm309, %v187
  %490 = vst.msk [vmem:[%s1 + $0x5a0] sm:$0xff] %vm309, %v188
  %491 = vst.msk [vmem:[%s1 + $0x5a8] sm:$0xff] %vm309, %v189
  %492 = vst.msk [vmem:[%s1 + $0x5b0] sm:$0xff] %vm309, %v190
  %493 = vst.msk [vmem:[%s1 + $0x5b8] sm:$0xff] %vm309, %v191
  %494 = vst.msk [vmem:[%s1 + $0x5c0] sm:$0xff] %vm309, %v192
  %495 = vst.msk [vmem:[%s1 + $0x5c8] sm:$0xff] %vm309, %v193
  %496 = vst.msk [vmem:[%s1 + $0x5d0] sm:$0xff] %vm309, %v194
  %497 = vst.msk [vmem:[%s1 + $0x5d8] sm:$0xff] %vm309, %v195
  %498 = vst.msk [vmem:[%s1 + $0x5e0] sm:$0xff] %vm309, %v196
  %499 = vst.msk [vmem:[%s1 + $0x5e8] sm:$0xff] %vm309, %v197
  %500 = vst.msk [vmem:[%s1 + $0x5f0] sm:$0xff] %vm309, %v198
  %501 = vst.msk [vmem:[%s1 + $0x5f8] sm:$0xff] %vm309, %v199
  %502 = vst.msk [vmem:[%s1 + $0x600] sm:$0xff] %vm309, %v200
  %503 = vst.msk [vmem:[%s1 + $0x608] sm:$0xff] %vm309, %v201
  %504 = vst.msk [vmem:[%s1 + $0x610] sm:$0xff] %vm309, %v202
  %505 = vst.msk [vmem:[%s1 + $0x618] sm:$0xff] %vm309, %v203
  %506 = vst.msk [vmem:[%s1 + $0x620] sm:$0xff] %vm309, %v204
  %507 = vst.msk [vmem:[%s1 + $0x628] sm:$0xff] %vm309, %v205
  %508 = vst.msk [vmem:[%s1 + $0x630] sm:$0xff] %vm309, %v206
  %509 = vst.msk [vmem:[%s1 + $0x638] sm:$0xff] %vm309, %v207
  %510 = vst.msk [vmem:[%s1 + $0x640] sm:$0xff] %vm309, %v208
  %511 = vst.msk [vmem:[%s1 + $0x648] sm:$0xff] %vm309, %v209
  %512 = vst.msk [vmem:[%s1 + $0x650] sm:$0xff] %vm309, %v210
  %513 = vst.msk [vmem:[%s1 + $0x658] sm:$0xff] %vm309, %v211
  %514 = vst.msk [vmem:[%s1 + $0x660] sm:$0xff] %vm309, %v212
  %515 = vst.msk [vmem:[%s1 + $0x668] sm:$0xff] %vm309, %v213
  %516 = vst.msk [vmem:[%s1 + $0x670] sm:$0xff] %vm309, %v214
  %517 = vst.msk [vmem:[%s1 + $0x678] sm:$0xff] %vm309, %v215
  %518 = vst.msk [vmem:[%s1 + $0x680] sm:$0xff] %vm309, %v216
  %519 = vst.msk [vmem:[%s1 + $0x688] sm:$0xff] %vm309, %v217
  %520 = vst.msk [vmem:[%s1 + $0x690] sm:$0xff] %vm309, %v218
  %521 = vst.msk [vmem:[%s1 + $0x698] sm:$0xff] %vm309, %v219
  %522 = vst.msk [vmem:[%s1 + $0x6a0] sm:$0xff] %vm309, %v220
  %523 = vst.msk [vmem:[%s1 + $0x6a8] sm:$0xff] %vm309, %v221
  %524 = vst.msk [vmem:[%s1 + $0x6b0] sm:$0xff] %vm309, %v222
  %525 = vst.msk [vmem:[%s1 + $0x6b8] sm:$0xff] %vm309, %v223
  %526 = vst.msk [vmem:[%s1 + $0x6c0] sm:$0xff] %vm309, %v224
  %527 = vst.msk [vmem:[%s1 + $0x6c8] sm:$0xff] %vm309, %v225
  %528 = vst.msk [vmem:[%s1 + $0x6d0] sm:$0xff] %vm309, %v226
  %529 = vst.msk [vmem:[%s1 + $0x6d8] sm:$0xff] %vm309, %v227
  %530 = vst.msk [vmem:[%s1 + $0x6e0] sm:$0xff] %vm309, %v228
  %531 = vst.msk [vmem:[%s1 + $0x6e8] sm:$0xff] %vm309, %v229
  %532 = vst.msk [vmem:[%s1 + $0x6f0] sm:$0xff] %vm309, %v230
  %533 = vst.msk [vmem:[%s1 + $0x6f8] sm:$0xff] %vm309, %v231
  %534 = vst.msk [vmem:[%s1 + $0x700] sm:$0xff] %vm309, %v232
  %535 = vst.msk [vmem:[%s1 + $0x708] sm:$0xff] %vm309, %v233
  %536 = vst.msk [vmem:[%s1 + $0x710] sm:$0xff] %vm309, %v234
  %537 = vst.msk [vmem:[%s1 + $0x718] sm:$0xff] %vm309, %v235
  %538 = vst.msk [vmem:[%s1 + $0x720] sm:$0xff] %vm309, %v236
  %539 = vst.msk [vmem:[%s1 + $0x728] sm:$0xff] %vm309, %v237
  %540 = vst.msk [vmem:[%s1 + $0x730] sm:$0xff] %vm309, %v238
  %541 = vst.msk [vmem:[%s1 + $0x738] sm:$0xff] %vm309, %v239
  %542 = vst.msk [vmem:[%s1 + $0x740] sm:$0xff] %vm309, %v240
  %543 = vst.msk [vmem:[%s1 + $0x748] sm:$0xff] %vm309, %v241
  %544 = vst.msk [vmem:[%s1 + $0x750] sm:$0xff] %vm309, %v242
  %545 = vst.msk [vmem:[%s1 + $0x758] sm:$0xff] %vm309, %v243
  %546 = vst.msk [vmem:[%s1 + $0x760] sm:$0xff] %vm309, %v244
  %547 = vst.msk [vmem:[%s1 + $0x768] sm:$0xff] %vm309, %v245
  %548 = vst.msk [vmem:[%s1 + $0x770] sm:$0xff] %vm309, %v246
  %549 = vst.msk [vmem:[%s1 + $0x778] sm:$0xff] %vm309, %v247
  %550 = vst.msk [vmem:[%s1 + $0x780] sm:$0xff] %vm309, %v248
  %551 = vst.msk [vmem:[%s1 + $0x788] sm:$0xff] %vm309, %v249
  %552 = vst.msk [vmem:[%s1 + $0x790] sm:$0xff] %vm309, %v250
  %553 = vst.msk [vmem:[%s1 + $0x798] sm:$0xff] %vm309, %v251
  %554 = vst.msk [vmem:[%s1 + $0x7a0] sm:$0xff] %vm309, %v252
  %555 = vst.msk [vmem:[%s1 + $0x7a8] sm:$0xff] %vm309, %v253
  %556 = vst.msk [vmem:[%s1 + $0x7b0] sm:$0xff] %vm309, %v254
  %557 = vst.msk [vmem:[%s1 + $0x7b8] sm:$0xff] %vm309, %v255
  %558 = vst.msk [vmem:[%s1 + $0x7c0] sm:$0xff] %vm309, %v256
  %559 = vst.msk [vmem:[%s1 + $0x7c8] sm:$0xff] %vm309, %v257
  %560 = vst.msk [vmem:[%s1 + $0x7d0] sm:$0xff] %vm309, %v258
  %561 = vst.msk [vmem:[%s1 + $0x7d8] sm:$0xff] %vm309, %v259
  %562 = vst.msk [vmem:[%s1 + $0x7e0] sm:$0xff] %vm309, %v260
  %563 = vst.msk [vmem:[%s1 + $0x7e8] sm:$0xff] %vm309, %v261
  %564 = vst.msk [vmem:[%s1 + $0x7f0] sm:$0xff] %vm309, %v262
  %565 = vst.msk [vmem:[%s1 + $0x7f8] sm:$0xff] %vm309, %v263
  %566 = vst.msk [vmem:[%s1 + $0x800] sm:$0xff] %vm309, %v264
  %567 = vst.msk [vmem:[%s1 + $0x808] sm:$0xff] %vm309, %v265
  %568 = vst.msk [vmem:[%s1 + $0x810] sm:$0xff] %vm309, %v266
  %569 = vst.msk [vmem:[%s1 + $0x818] sm:$0xff] %vm309, %v267
  %570 = vst.msk [vmem:[%s1 + $0x820] sm:$0xff] %vm309, %v268
  %571 = vst.msk [vmem:[%s1 + $0x828] sm:$0xff] %vm309, %v269
  %572 = vst.msk [vmem:[%s1 + $0x830] sm:$0xff] %vm309, %v270
  %573 = vst.msk [vmem:[%s1 + $0x838] sm:$0xff] %vm309, %v271
  %574 = vst.msk [vmem:[%s1 + $0x840] sm:$0xff] %vm309, %v272
  %575 = vst.msk [vmem:[%s1 + $0x848] sm:$0xff] %vm309, %v273
  %576 = vst.msk [vmem:[%s1 + $0x850] sm:$0xff] %vm309, %v274
  %577 = vst.msk [vmem:[%s1 + $0x858] sm:$0xff] %vm309, %v275
  %578 = vst.msk [vmem:[%s1 + $0x860] sm:$0xff] %vm309, %v276
  %579 = vst.msk [vmem:[%s1 + $0x868] sm:$0xff] %vm309, %v277
  %580 = vst.msk [vmem:[%s1 + $0x870] sm:$0xff] %vm309, %v278
  %581 = vst.msk [vmem:[%s1 + $0x878] sm:$0xff] %vm309, %v279
  %582 = vst.msk [vmem:[%s1 + $0x880] sm:$0xff] %vm309, %v280
  %583 = vst.msk [vmem:[%s1 + $0x888] sm:$0xff] %vm309, %v281
  %584 = vst.msk [vmem:[%s1 + $0x890] sm:$0xff] %vm309, %v282
  %585 = vst.msk [vmem:[%s1 + $0x898] sm:$0xff] %vm309, %v283
  %586 = vst.msk [vmem:[%s1 + $0x8a0] sm:$0xff] %vm309, %v284
  %587 = vst.msk [vmem:[%s1 + $0x8a8] sm:$0xff] %vm309, %v285
  %588 = vst.msk [vmem:[%s1 + $0x8b0] sm:$0xff] %vm309, %v286
  %589 = vst.msk [vmem:[%s1 + $0x8b8] sm:$0xff] %vm309, %v287
  %590 = vst.msk [vmem:[%s1 + $0x8c0] sm:$0xff] %vm309, %v288
  %591 = vst.msk [vmem:[%s1 + $0x8c8] sm:$0xff] %vm309, %v289
  %592 = vst.msk [vmem:[%s1 + $0x8d0] sm:$0xff] %vm309, %v290
  %593 = vst.msk [vmem:[%s1 + $0x8d8] sm:$0xff] %vm309, %v291
  %594 = vst.msk [vmem:[%s1 + $0x8e0] sm:$0xff] %vm309, %v292
  %595 = vst.msk [vmem:[%s1 + $0x8e8] sm:$0xff] %vm309, %v293
  %596 = vst.msk [vmem:[%s1 + $0x8f0] sm:$0xff] %vm309, %v294
  %597 = vst.msk [vmem:[%s1 + $0x8f8] sm:$0xff] %vm309, %v295
  %598 = vst.msk [vmem:[%s1 + $0x900] sm:$0xff] %vm309, %v296
  %599 = vst.msk [vmem:[%s1 + $0x908] sm:$0xff] %vm309, %v297
  %600 = vst.msk [vmem:[%s1 + $0x910] sm:$0xff] %vm309, %v298
  %601 = vst.msk [vmem:[%s1 + $0x918] sm:$0xff] %vm309, %v299
  %602 = vst.msk [vmem:[%s1 + $0x920] sm:$0xff] %vm309, %v300
  %603 = vst.msk [vmem:[%s1 + $0x928] sm:$0xff] %vm309, %v301
  %604 = vst.msk [vmem:[%s1 + $0x930] sm:$0xff] %vm309, %v302
  %605 = vst.msk [vmem:[%s1 + $0x938] sm:$0xff] %vm309, %v303
  %606 = vst.msk [vmem:[%s1 + $0x940] sm:$0xff] %vm309, %v304
  %607 = vst.msk [vmem:[%s1 + $0x948] sm:$0xff] %vm309, %v305
  %608 = vst.msk [vmem:[%s1 + $0x950] sm:$0xff] %vm309, %v306
  %609 = vst.msk [vmem:[%s1 + $0x958] sm:$0xff] %vm309, %v307
  %vm610 = vcmask 122880
  %611 = vst.msk [vmem:[%s1 + $0x960] sm:$0x1] %vm610, %v308
  // Predicated region
  $region6: #{tpu_custom_call.1} parent=0 // pred_check
    _
  $region7: #{tpu_custom_call.1} parent=0 // pred_check_branch
    %613 = sbr.rel (0) target = $region9
  $region8: #{tpu_custom_call.1} parent=0 // pred_region
    _
  $region9: #{tpu_custom_call.1} parent=0 // pred_fallthru
    _
  // Predicated region
  $region10: #{tpu_custom_call.1} parent=0 // pred_check
    _
  $region11: #{tpu_custom_call.1} parent=0 // pred_check_branch
    %615 = sbr.rel (0) target = $region13
  $region12: #{tpu_custom_call.1} parent=0 // pred_region
    _
  $region13: #{tpu_custom_call.1} parent=0 // pred_fallthru
    _

</llo_original>
